<compile_context>
chip_gen: v6e
topology: v6e:2x2x1
jax: 0.10.0
libtpu: 0.0.40
codegen_flags: <defaults>
</compile_context>

<pallas_src>
import functools

import jax
import jax.numpy as jnp
from jax.experimental import pallas as pl
from jax.experimental.pallas import tpu as pltpu

LANE = 128       # padded feature width (hidden dim / MXU lane width)
OUT_LANES = 8    # packed output width: lane0=action, lane1=log_prob, lane2=entropy


def _round_up(x, m):
    return ((x + m - 1) // m) * m


def _pad2(a, rows, cols):
    out = jnp.zeros((rows, cols), jnp.float32)
    return out.at[: a.shape[0], : a.shape[1]].set(a.astype(jnp.float32))


def _actor_kernel(action_dim, inv_temperature,
                  obs_ref, noise_ref, h1_ref, w2_ref, b2_ref, w3_ref, b3_ref,
                  out_ref):
    bb = obs_ref.shape[0]          # batch block (rows / sublanes)
    s_pad = h1_ref.shape[0]        # padded number of states
    n8 = noise_ref.shape[1]        # padded action width (<= LANE)

    # ---- fused Embedding + Linear1 + ReLU: gather pre-computed h1 rows via one-hot bf16 MXU matmul ----
    idx = obs_ref[...]                                                 # (bb, 1) int32
    srow = jax.lax.broadcasted_iota(jnp.int32, (bb, s_pad), 1)
    onehot = (srow == idx).astype(jnp.bfloat16)                        # 0/1 exact in bf16
    h1 = jnp.dot(onehot, h1_ref[...], preferred_element_type=jnp.float32)   # (bb, LANE) f32

    # ---- remaining MLP: bf16 MXU matmuls, f32 accumulation / elementwise ----
    h2 = jnp.maximum(
        jnp.dot(h1.astype(jnp.bfloat16), w2_ref[...],
                preferred_element_type=jnp.float32) + b2_ref[...], 0.0)
    logits = jnp.dot(h2.astype(jnp.bfloat16), w3_ref[...],
                     preferred_element_type=jnp.float32) + b3_ref[...]      # (bb, LANE) f32

    # ---- everything downstream only touches the first `action_dim` lanes: work on a narrow slab ----
    lg = logits[:, :n8]                                                # (bb, n8)
    col = jax.lax.broadcasted_iota(jnp.int32, (bb, n8), 1)
    valid = col < action_dim
    masked = jnp.where(valid, lg, jnp.float32(-1e30))

    # ---- log-softmax / entropy (Categorical(logits)) ----
    m = jnp.max(masked, axis=-1, keepdims=True)                        # (bb, 1)
    z = masked - m
    ez = jnp.where(valid, jnp.exp(z), 0.0)
    s = jnp.sum(ez, axis=-1, keepdims=True)
    log_s = jnp.log(s)
    # exact entropy: H = log(s) - sum(ez*z)/s  (divides only on (bb,1) scalars, no approx recip bias)
    sum_ez_z = jnp.sum(jnp.where(valid, ez * z, 0.0), axis=-1, keepdims=True)
    entropy = log_s - sum_ez_z / s

    # ---- Gumbel-max sample from Categorical(logits / temperature); Gumbel noise streamed from host ----
    perturbed = jnp.where(valid,
                          masked * jnp.float32(inv_temperature) + noise_ref[...],
                          jnp.float32(-1e30))
    mx = jnp.max(perturbed, axis=-1, keepdims=True)
    cand = jnp.where(perturbed == mx, col, jnp.int32(2 ** 30))
    action = jnp.min(cand, axis=-1, keepdims=True)                     # (bb, 1) int32

    # ---- log_prob of the sampled action (under the temperature-1 dist, as in the PyTorch ref) ----
    logp = z - log_s
    sel = (col == action) & valid
    log_prob = jnp.sum(jnp.where(sel, logp, 0.0), axis=-1, keepdims=True)

    # ---- narrow packed output: lane0 = action, lane1 = log_prob, lane2 = entropy ----
    ocol = jax.lax.broadcasted_iota(jnp.int32, (bb, OUT_LANES), 1)
    packed = jnp.where(ocol == 0, action.astype(jnp.float32), jnp.float32(0.0))
    packed = jnp.where(ocol == 1, log_prob, packed)
    packed = jnp.where(ocol == 2, entropy, packed)
    out_ref[...] = packed


def prepare_actor_params(params):
    """One-time fold/pad of the module parameters into kernel-ready arrays (reuse every step)."""
    emb, (w1, b1), (w2, b2), (w3, b3) = params
    S = emb.shape[0]
    assert w2.shape[0] <= LANE and w3.shape[1] <= LANE
    s_pad = _round_up(max(S, LANE), LANE)
    # embed_dim is tiny: fold Embedding + Linear1 + ReLU into a per-state table (exact).
    h1_table = jax.nn.relu(emb.astype(jnp.float32) @ w1.astype(jnp.float32)
                           + b1.astype(jnp.float32))                   # (S, hidden)
    return dict(
        h1=_pad2(h1_table, s_pad, LANE).astype(jnp.bfloat16),          # bf16 MXU operand
        w2=_pad2(w2, LANE, LANE).astype(jnp.bfloat16),
        b2=_pad2(b2[None, :], 1, LANE),                                # biases stay f32
        w3=_pad2(w3, LANE, LANE).astype(jnp.bfloat16),
        b3=_pad2(b3[None, :], 1, LANE),
    )


def _pick_block(B, block_b):
    b8 = _round_up(B, 8)
    if b8 <= 16:
        return b8
    # keep >= 2 grid blocks so the "parallel" axis can shard across v7x's two TensorCores
    half = _round_up((B + 1) // 2, 8)
    return max(8, min(block_b, half))


def _vmem_limit_bytes(bb, s_pad, n8):
    weights = 2 * ((s_pad * LANE + 2 * LANE * LANE) * 2 + 2 * LANE * 4)   # bf16 weights + f32 biases
    blocks = 2 * bb * (4 + n8 * 4 + OUT_LANES * 4)                        # double-buffered obs/noise/out
    temps = bb * (s_pad * 2 + 4 * LANE * 4 + 12 * n8 * 4)                 # onehot + h1/h2/logits + narrow temps
    est = weights + blocks + temps
    return int(min(max(4 * est, 16 << 20), 48 << 20))


def actor_forward(obs, key, prepared, *, action_dim, temperature=1.0, block_b=1024):
    """obs: (B, 1) int32 state indices.  Returns (action, log_prob, entropy), each shape (B,)."""
    assert action_dim <= LANE
    B = obs.shape[0]
    bb = _pick_block(B, block_b)
    b_pad = _round_up(B, bb)
    n_blocks = b_pad // bb
    s_pad = prepared["h1"].shape[0]
    n8 = max(OUT_LANES, _round_up(action_dim, 8))

    obs_p = jnp.zeros((b_pad, 1), jnp.int32).at[:B, 0].set(obs.reshape(-1).astype(jnp.int32))
    # Gumbel noise for Categorical(logits/T).sample(); only the action lanes are needed.
    noise = jax.random.gumbel(key, (b_pad, n8), jnp.float32)

    kernel = functools.partial(_actor_kernel, action_dim, 1.0 / float(temperature))
    const = lambda i: (0, 0)                    # weights stay VMEM-resident across the grid

    weight_bytes = sum(int(v.size) * v.dtype.itemsize for v in prepared.values())
    cost = pl.CostEstimate(
        flops=2 * b_pad * (s_pad * LANE + 2 * LANE * LANE),
        transcendentals=b_pad * (n8 + 2),
        bytes_accessed=int(obs_p.size * 4 + noise.size * 4
                           + b_pad * OUT_LANES * 4 + weight_bytes),
    )

    packed = pl.pallas_call(
        kernel,
        out_shape=jax.ShapeDtypeStruct((b_pad, OUT_LANES), jnp.float32),
        grid_spec=pltpu.PrefetchScalarGridSpec(
            num_scalar_prefetch=0,
            grid=(n_blocks,),
            in_specs=[
                pl.BlockSpec((bb, 1), lambda i: (i, 0)),            # obs batch block
                pl.BlockSpec((bb, n8), lambda i: (i, 0)),           # Gumbel noise block
                pl.BlockSpec(prepared["h1"].shape, const),          # folded h1 table (bf16)
                pl.BlockSpec((LANE, LANE), const),                  # w2 (bf16)
                pl.BlockSpec((1, LANE), const),                     # b2
                pl.BlockSpec((LANE, LANE), const),                  # w3 (bf16)
                pl.BlockSpec((1, LANE), const),                     # b3
            ],
            out_specs=pl.BlockSpec((bb, OUT_LANES), lambda i: (i, 0)),
        ),
        compiler_params=pltpu.CompilerParams(
            dimension_semantics=("parallel",),
            vmem_limit_bytes=_vmem_limit_bytes(bb, s_pad, n8)),
        cost_estimate=cost,
    )(obs_p, noise, prepared["h1"], prepared["w2"], prepared["b2"],
      prepared["w3"], prepared["b3"])

    action = packed[:B, 0].astype(jnp.int32)
    log_prob = packed[:B, 1]
    entropy = packed[:B, 2]
    return action, log_prob, entropy


def init_params(key, *, max_states=100, embed_dim=1, hidden_dim=32, action_dim=4):
    ks = jax.random.split(key, 7)
    emb = jax.random.normal(ks[0], (max_states, embed_dim), jnp.float32)  # N(0,1) like nn.Embedding

    def linear(kw, kb, fan_in, fan_out):
        bound = 1.0 / jnp.sqrt(jnp.float32(fan_in))
        w = jax.random.uniform(kw, (fan_in, fan_out), jnp.float32, -bound, bound)
        b = jax.random.uniform(kb, (fan_out,), jnp.float32, -bound, bound)
        return w, b

    l1 = linear(ks[1], ks[2], embed_dim, hidden_dim)
    l2 = linear(ks[3], ks[4], hidden_dim, hidden_dim)
    l3 = linear(ks[5], ks[6], hidden_dim, action_dim)
    return emb, l1, l2, l3


if __name__ == "__main__":
    ACTION_DIM, HIDDEN_DIM, MAX_STATES, EMBED_DIM = 4, 32, 100, 1
    B = 8

    root = jax.random.PRNGKey(0)
    k_params, k_obs, k_noise = jax.random.split(root, 3)

    params = init_params(k_params, max_states=MAX_STATES, embed_dim=EMBED_DIM,
                         hidden_dim=HIDDEN_DIM, action_dim=ACTION_DIM)
    prepared = prepare_actor_params(params)     # pad / fold ONCE; reused every forward call
    prepared = jax.tree_util.tree_map(jax.block_until_ready, prepared)

    obs = jax.random.randint(k_obs, (B, 1), 0, MAX_STATES, dtype=jnp.int32)

    fwd = jax.jit(functools.partial(actor_forward, action_dim=ACTION_DIM, temperature=1.0))
    action, log_prob, entropy = fwd(obs, k_noise, prepared)
    jax.block_until_ready((action, log_prob, entropy))

    assert action.shape == (B,) and log_prob.shape == (B,) and entropy.shape == (B,)
    assert bool(jnp.all(action >= 0)) and bool(jnp.all(action < ACTION_DIM))
    assert bool(jnp.all(log_prob <= 0.0)) and bool(jnp.all(entropy >= 0.0))
    print("KERNEL_OK")
</pallas_src>

<mosaic_0001>
module attributes {stable_mosaic.version = 11 : i64} {
  func.func @_actor_kernel(%arg0: i32, %arg1: memref<8x1xi32, #tpu.memory_space<vmem>>, %arg2: memref<8x8xf32, #tpu.memory_space<vmem>>, %arg3: memref<128x128xbf16, #tpu.memory_space<vmem>>, %arg4: memref<128x128xbf16, #tpu.memory_space<vmem>>, %arg5: memref<1x128xf32, #tpu.memory_space<vmem>>, %arg6: memref<128x128xbf16, #tpu.memory_space<vmem>>, %arg7: memref<1x128xf32, #tpu.memory_space<vmem>>, %arg8: memref<8x8xf32, #tpu.memory_space<vmem>>) attributes {dimension_semantics = [#tpu.dimension_semantics<parallel>], iteration_bounds = array<i64: 1>, scalar_prefetch = 0 : i64, scratch_operands = 0 : i64, tpu.core_type = #tpu.core_type<tc>, window_params = [{transform_indices = @transform_0, window_bounds = array<i64: 8, 1>}, {transform_indices = @transform_1, window_bounds = array<i64: 8, 8>}, {pipeline_mode = #tpu.pipeline_mode<synchronous>, transform_indices = @transform_2, window_bounds = array<i64: 128, 128>}, {pipeline_mode = #tpu.pipeline_mode<synchronous>, transform_indices = @transform_3, window_bounds = array<i64: 128, 128>}, {pipeline_mode = #tpu.pipeline_mode<synchronous>, transform_indices = @transform_4, window_bounds = array<i64: 1, 128>}, {pipeline_mode = #tpu.pipeline_mode<synchronous>, transform_indices = @transform_5, window_bounds = array<i64: 128, 128>}, {pipeline_mode = #tpu.pipeline_mode<synchronous>, transform_indices = @transform_6, window_bounds = array<i64: 1, 128>}, {transform_indices = @transform_7, window_bounds = array<i64: 8, 8>}]} {
    %c0 = arith.constant 0 : index
    %c0_0 = arith.constant 0 : index
    %0 = vector.load %arg1[%c0, %c0_0] : memref<8x1xi32, #tpu.memory_space<vmem>>, vector<8x1xi32>
    %1 = tpu.iota {dimensions = array<i32: 1>} : vector<8x128xi32>
    %2 = vector.broadcast %0 : vector<8x1xi32> to vector<8x128xi32>
    %3 = arith.cmpi eq, %1, %2 : vector<8x128xi32>
    %4 = arith.extui %3 : vector<8x128xi1> to vector<8x128xi32>
    %5 = arith.sitofp %4 : vector<8x128xi32> to vector<8x128xf32>
    %6 = arith.truncf %5 : vector<8x128xf32> to vector<8x128xbf16>
    %c0_1 = arith.constant 0 : index
    %c0_2 = arith.constant 0 : index
    %7 = vector.load %arg3[%c0_1, %c0_2] : memref<128x128xbf16, #tpu.memory_space<vmem>>, vector<128x128xbf16>
    %cst = arith.constant dense<0.000000e+00> : vector<8x128xf32>
    %8 = tpu.matmul %6, %7, %cst {dimension_numbers = #tpu.dot_dimension_numbers<[1], [0], [0], [1], [0, 0, 1, 1], [], []>} : vector<8x128xbf16>, vector<128x128xbf16>, vector<8x128xf32> -> vector<8x128xf32>
    %9 = arith.truncf %8 : vector<8x128xf32> to vector<8x128xbf16>
    %c0_3 = arith.constant 0 : index
    %c0_4 = arith.constant 0 : index
    %10 = vector.load %arg4[%c0_3, %c0_4] : memref<128x128xbf16, #tpu.memory_space<vmem>>, vector<128x128xbf16>
    %cst_5 = arith.constant dense<0.000000e+00> : vector<8x128xf32>
    %11 = tpu.matmul %9, %10, %cst_5 {dimension_numbers = #tpu.dot_dimension_numbers<[1], [0], [0], [1], [0, 0, 1, 1], [], []>} : vector<8x128xbf16>, vector<128x128xbf16>, vector<8x128xf32> -> vector<8x128xf32>
    %c0_6 = arith.constant 0 : index
    %c0_7 = arith.constant 0 : index
    %12 = vector.load %arg5[%c0_6, %c0_7] : memref<1x128xf32, #tpu.memory_space<vmem>>, vector<1x128xf32>
    %13 = vector.broadcast %12 : vector<1x128xf32> to vector<8x128xf32>
    %14 = arith.addf %11, %13 : vector<8x128xf32>
    %cst_8 = arith.constant 0.000000e+00 : f32
    %15 = vector.broadcast %cst_8 : f32 to vector<8x128xf32>
    %16 = arith.maximumf %14, %15 : vector<8x128xf32>
    %17 = arith.truncf %16 : vector<8x128xf32> to vector<8x128xbf16>
    %c0_9 = arith.constant 0 : index
    %c0_10 = arith.constant 0 : index
    %18 = vector.load %arg6[%c0_9, %c0_10] : memref<128x128xbf16, #tpu.memory_space<vmem>>, vector<128x128xbf16>
    %cst_11 = arith.constant dense<0.000000e+00> : vector<8x128xf32>
    %19 = tpu.matmul %17, %18, %cst_11 {dimension_numbers = #tpu.dot_dimension_numbers<[1], [0], [0], [1], [0, 0, 1, 1], [], []>} : vector<8x128xbf16>, vector<128x128xbf16>, vector<8x128xf32> -> vector<8x128xf32>
    %c0_12 = arith.constant 0 : index
    %c0_13 = arith.constant 0 : index
    %20 = vector.load %arg7[%c0_12, %c0_13] : memref<1x128xf32, #tpu.memory_space<vmem>>, vector<1x128xf32>
    %21 = vector.broadcast %20 : vector<1x128xf32> to vector<8x128xf32>
    %22 = arith.addf %19, %21 : vector<8x128xf32>
    %23 = vector.extract_strided_slice %22 {offsets = [0, 0], sizes = [8, 8], strides = [1, 1]} : vector<8x128xf32> to vector<8x8xf32>
    %24 = tpu.iota {dimensions = array<i32: 1>} : vector<8x8xi32>
    %c4_i32 = arith.constant 4 : i32
    %25 = vector.broadcast %c4_i32 : i32 to vector<8x8xi32>
    %26 = arith.cmpi slt, %24, %25 : vector<8x8xi32>
    %cst_14 = arith.constant -1.000000e+30 : f32
    %27 = vector.broadcast %cst_14 : f32 to vector<8x8xf32>
    %28 = arith.select %26, %23, %27 : vector<8x8xi1>, vector<8x8xf32>
    %cst_15 = arith.constant dense<0xFF800000> : vector<8xf32>
    %29 = vector.multi_reduction <maximumf>, %28, %cst_15 [1] : vector<8x8xf32> to vector<8xf32>
    %30 = vector.shape_cast %29 : vector<8xf32> to vector<8x1xf32>
    %31 = vector.broadcast %30 : vector<8x1xf32> to vector<8x8xf32>
    %32 = arith.subf %28, %31 : vector<8x8xf32>
    %33 = math.exp %32 : vector<8x8xf32>
    %cst_16 = arith.constant 0.000000e+00 : f32
    %34 = vector.broadcast %cst_16 : f32 to vector<8x8xf32>
    %35 = arith.select %26, %33, %34 : vector<8x8xi1>, vector<8x8xf32>
    %cst_17 = arith.constant dense<0.000000e+00> : vector<8xf32>
    %36 = vector.multi_reduction <add>, %35, %cst_17 [1] : vector<8x8xf32> to vector<8xf32>
    %37 = vector.shape_cast %36 : vector<8xf32> to vector<8x1xf32>
    %38 = math.log %37 : vector<8x1xf32>
    %39 = arith.mulf %35, %32 : vector<8x8xf32>
    %cst_18 = arith.constant 0.000000e+00 : f32
    %40 = vector.broadcast %cst_18 : f32 to vector<8x8xf32>
    %41 = arith.select %26, %39, %40 : vector<8x8xi1>, vector<8x8xf32>
    %cst_19 = arith.constant dense<0.000000e+00> : vector<8xf32>
    %42 = vector.multi_reduction <add>, %41, %cst_19 [1] : vector<8x8xf32> to vector<8xf32>
    %43 = vector.shape_cast %42 : vector<8xf32> to vector<8x1xf32>
    %44 = arith.divf %43, %37 : vector<8x1xf32>
    %45 = arith.subf %38, %44 : vector<8x1xf32>
    %cst_20 = arith.constant 1.000000e+00 : f32
    %46 = vector.broadcast %cst_20 : f32 to vector<8x8xf32>
    %47 = arith.mulf %28, %46 : vector<8x8xf32>
    %c0_21 = arith.constant 0 : index
    %c0_22 = arith.constant 0 : index
    %48 = vector.load %arg2[%c0_21, %c0_22] : memref<8x8xf32, #tpu.memory_space<vmem>>, vector<8x8xf32>
    %49 = arith.addf %47, %48 : vector<8x8xf32>
    %cst_23 = arith.constant -1.000000e+30 : f32
    %50 = vector.broadcast %cst_23 : f32 to vector<8x8xf32>
    %51 = arith.select %26, %49, %50 : vector<8x8xi1>, vector<8x8xf32>
    %cst_24 = arith.constant dense<0xFF800000> : vector<8xf32>
    %52 = vector.multi_reduction <maximumf>, %51, %cst_24 [1] : vector<8x8xf32> to vector<8xf32>
    %53 = vector.shape_cast %52 : vector<8xf32> to vector<8x1xf32>
    %54 = vector.broadcast %53 : vector<8x1xf32> to vector<8x8xf32>
    %55 = arith.cmpf oeq, %51, %54 : vector<8x8xf32>
    %c1073741824_i32 = arith.constant 1073741824 : i32
    %56 = vector.broadcast %c1073741824_i32 : i32 to vector<8x8xi32>
    %57 = arith.select %55, %24, %56 : vector<8x8xi1>, vector<8x8xi32>
    %cst_25 = arith.constant dense<2147483647> : vector<8xi32>
    %58 = vector.multi_reduction <minsi>, %57, %cst_25 [1] : vector<8x8xi32> to vector<8xi32>
    %59 = vector.shape_cast %58 : vector<8xi32> to vector<8x1xi32>
    %60 = vector.broadcast %38 : vector<8x1xf32> to vector<8x8xf32>
    %61 = arith.subf %32, %60 : vector<8x8xf32>
    %62 = vector.broadcast %59 : vector<8x1xi32> to vector<8x8xi32>
    %63 = arith.cmpi eq, %24, %62 : vector<8x8xi32>
    %64 = arith.andi %63, %26 : vector<8x8xi1>
    %cst_26 = arith.constant 0.000000e+00 : f32
    %65 = vector.broadcast %cst_26 : f32 to vector<8x8xf32>
    %66 = arith.select %64, %61, %65 : vector<8x8xi1>, vector<8x8xf32>
    %cst_27 = arith.constant dense<0.000000e+00> : vector<8xf32>
    %67 = vector.multi_reduction <add>, %66, %cst_27 [1] : vector<8x8xf32> to vector<8xf32>
    %68 = vector.shape_cast %67 : vector<8xf32> to vector<8x1xf32>
    %69 = tpu.iota {dimensions = array<i32: 1>} : vector<8x8xi32>
    %c0_i32 = arith.constant 0 : i32
    %70 = vector.broadcast %c0_i32 : i32 to vector<8x8xi32>
    %71 = arith.cmpi eq, %69, %70 : vector<8x8xi32>
    %72 = arith.sitofp %59 : vector<8x1xi32> to vector<8x1xf32>
    %cst_28 = arith.constant 0.000000e+00 : f32
    %73 = vector.shape_cast %72 : vector<8x1xf32> to vector<8x1xf32>
    %74 = vector.broadcast %73 : vector<8x1xf32> to vector<8x8xf32>
    %75 = vector.broadcast %cst_28 : f32 to vector<8x8xf32>
    %76 = arith.select %71, %74, %75 : vector<8x8xi1>, vector<8x8xf32>
    %c1_i32 = arith.constant 1 : i32
    %77 = vector.broadcast %c1_i32 : i32 to vector<8x8xi32>
    %78 = arith.cmpi eq, %69, %77 : vector<8x8xi32>
    %79 = vector.shape_cast %68 : vector<8x1xf32> to vector<8x1xf32>
    %80 = vector.broadcast %79 : vector<8x1xf32> to vector<8x8xf32>
    %81 = arith.select %78, %80, %76 : vector<8x8xi1>, vector<8x8xf32>
    %c2_i32 = arith.constant 2 : i32
    %82 = vector.broadcast %c2_i32 : i32 to vector<8x8xi32>
    %83 = arith.cmpi eq, %69, %82 : vector<8x8xi32>
    %84 = vector.shape_cast %45 : vector<8x1xf32> to vector<8x1xf32>
    %85 = vector.broadcast %84 : vector<8x1xf32> to vector<8x8xf32>
    %86 = arith.select %83, %85, %81 : vector<8x8xi1>, vector<8x8xf32>
    %c0_29 = arith.constant 0 : index
    %c0_30 = arith.constant 0 : index
    %87 = vector.load %arg8[%c0_29, %c0_30] : memref<8x8xf32, #tpu.memory_space<vmem>>, vector<8x8xf32>
    tpu.vector_store %arg8[%c0_29, %c0_30], %86 {strides = array<i32>} : memref<8x8xf32, #tpu.memory_space<vmem>>, vector<8x8xf32>,
    return
  }
  func.func @transform_0(%arg0: i32) -> (i32, i32) {
    %c0_i32 = arith.constant 0 : i32
    %c0_i32_0 = arith.constant 0 : i32
    return %arg0, %c0_i32 : i32, i32
  }
  func.func @transform_1(%arg0: i32) -> (i32, i32) {
    %c0_i32 = arith.constant 0 : i32
    %c0_i32_0 = arith.constant 0 : i32
    return %arg0, %c0_i32 : i32, i32
  }
  func.func @transform_2(%arg0: i32) -> (i32, i32) {
    %c0_i32 = arith.constant 0 : i32
    %c0_i32_0 = arith.constant 0 : i32
    %c0_i32_1 = arith.constant 0 : i32
    return %c0_i32, %c0_i32_0 : i32, i32
  }
  func.func @transform_3(%arg0: i32) -> (i32, i32) {
    %c0_i32 = arith.constant 0 : i32
    %c0_i32_0 = arith.constant 0 : i32
    %c0_i32_1 = arith.constant 0 : i32
    return %c0_i32, %c0_i32_0 : i32, i32
  }
  func.func @transform_4(%arg0: i32) -> (i32, i32) {
    %c0_i32 = arith.constant 0 : i32
    %c0_i32_0 = arith.constant 0 : i32
    %c0_i32_1 = arith.constant 0 : i32
    return %c0_i32, %c0_i32_0 : i32, i32
  }
  func.func @transform_5(%arg0: i32) -> (i32, i32) {
    %c0_i32 = arith.constant 0 : i32
    %c0_i32_0 = arith.constant 0 : i32
    %c0_i32_1 = arith.constant 0 : i32
    return %c0_i32, %c0_i32_0 : i32, i32
  }
  func.func @transform_6(%arg0: i32) -> (i32, i32) {
    %c0_i32 = arith.constant 0 : i32
    %c0_i32_0 = arith.constant 0 : i32
    %c0_i32_1 = arith.constant 0 : i32
    return %c0_i32, %c0_i32_0 : i32, i32
  }
  func.func @transform_7(%arg0: i32) -> (i32, i32) {
    %c0_i32 = arith.constant 0 : i32
    %c0_i32_0 = arith.constant 0 : i32
    return %arg0, %c0_i32 : i32, i32
  }
}

</mosaic_0001>

<llo_original>
// kernel: actor_forward.1
$region0: #{actor_forward.1}
  #allocation0 [shape = 'u32[]', space=smem, size = 0x4, offset = 0x4, fixed_abs, tag = 'smem constant byte address 0x4 - core index']
  #allocation1 [shape = 'u32[144,128]{1,0:T(1,128)}', space=vmem, size = 0x12000, scoped, tag = 'internal scratch']
  %s0 = inlined_call_operand.vmem [shape: s32[8,1], index: 0, kind: input, shape index: {}]
  %s1 = inlined_call_operand.vmem [shape: f32[8,8], index: 1, kind: input, shape index: {}]
  %s2 = inlined_call_operand.hbm [shape: bf16[128,128], index: 2, kind: input, shape index: {}]
  %s3 = inlined_call_operand.hbm [shape: bf16[128,128], index: 3, kind: input, shape index: {}]
  %s4 = inlined_call_operand.vmem [shape: f32[1,128], index: 4, kind: input, shape index: {}]
  %s5 = inlined_call_operand.hbm [shape: bf16[128,128], index: 5, kind: input, shape index: {}]
  %s6 = inlined_call_operand.vmem [shape: f32[1,128], index: 6, kind: input, shape index: {}]
  %s7 = inlined_call_operand.vmem [shape: f32[8,8], index: 7, kind: output, shape index: {}]
  %s8 = sld [smem:[#allocation0]]
  $region50: #{actor_forward.1} parent=0
    _
  %s10 = ssub.s32 1, %s8
  %s11 = scalar_select 0, %s10, %s8
  $region1: #{actor_forward.1} parent=0
    #allocation2 [shape = 'u8[32768]{0}', space=vmem, size = 0x8000, scoped, tag = 'input window, operand 2, single buffered']
    #allocation3 [shape = 's32[1]{0}', space=sflag, size = 0x4, scoped, tag = 'scoped memory for actor_forward.1']
    #allocation4 [shape = 'u8[32768]{0}', space=vmem, size = 0x8000, scoped, tag = 'input window, operand 3, single buffered']
    #allocation5 [shape = 's32[1]{0}', space=sflag, size = 0x4, scoped, tag = 'scoped memory for actor_forward.1']
    #allocation6 [shape = 'u8[32768]{0}', space=vmem, size = 0x8000, scoped, tag = 'input window, operand 5, single buffered']
    %12 = vsyncpa [#allocation3], 0
    %13 = vsyncpa [#allocation5], 0
    // Predicated region
    $region2: #{actor_forward.1} parent=1 // pred_check
      _
    $region3: #{actor_forward.1} parent=1 // pred_check_branch
      %15 = sbr.rel (0) target = $region5
    $region4: #{actor_forward.1} parent=1 // pred_region
      _
    $region5: #{actor_forward.1} parent=1 // pred_fallthru
      _
    // Predicated region
    $region6: #{actor_forward.1} parent=1 // pred_check
      _
    $region7: #{actor_forward.1} parent=1 // pred_check_branch
      %17 = sbr.rel (0) target = $region9
    $region8: #{actor_forward.1} parent=1 // pred_region
      _
    $region9: #{actor_forward.1} parent=1 // pred_fallthru
      _
    // Predicated region
    $region10: #{actor_forward.1} parent=1 // pred_check
      _
    $region11: #{actor_forward.1} parent=1 // pred_check_branch
      %19 = sbr.rel (0) target = $region13
    $region12: #{actor_forward.1} parent=1 // pred_region
      %s21 = ssub.s32 1024, 1024
      %22 = vsyncadd [#allocation3], %s21
      %s23 = sshll.u32 [#allocation2], 4
      %s24 = int_to_ptr.vmem [resolvable:$true] %s23
      %29 = dma.hbm_to_vmem [thread:$0]  %s2, 1024, %s24, [#allocation3], 64, 64, 4
    $region13: #{actor_forward.1} parent=1 // pred_fallthru
      _
    // Predicated region
    $region14: #{actor_forward.1} parent=1 // pred_check
      _
    $region15: #{actor_forward.1} parent=1 // pred_check_branch
      %31 = sbr.rel (0) target = $region17
    $region16: #{actor_forward.1} parent=1 // pred_region
      %s33 = ssub.s32 1024, 1024
      %34 = vsyncadd [#allocation5], %s33
      %s35 = sshll.u32 [#allocation4], 4
      %s36 = int_to_ptr.vmem [resolvable:$true] %s35
      %41 = dma.hbm_to_vmem [thread:$0]  %s3, 1024, %s36, [#allocation5], 64, 64, 4
    $region17: #{actor_forward.1} parent=1 // pred_fallthru
      _
    // Predicated region
    $region18: #{actor_forward.1} parent=1 // pred_check
      _
    $region19: #{actor_forward.1} parent=1 // pred_check_branch
      %43 = sbr.rel (0) target = $region21
    $region20: #{actor_forward.1} parent=1 // pred_region
      _
    $region21: #{actor_forward.1} parent=1 // pred_fallthru
      _
    // Predicated region
    $region22: #{actor_forward.1} parent=1 // pred_check
      _
    $region23: #{actor_forward.1} parent=1 // pred_check_branch
      %45 = sbr.rel (0) target = $region25
    $region24: #{actor_forward.1} parent=1 // pred_region
      %s47 = ssub.s32 1024, 1024
      %48 = vsyncadd [#allocation5], %s47
      %s49 = sshll.u32 [#allocation6], 4
      %s50 = int_to_ptr.vmem [resolvable:$true] %s49
      %55 = dma.hbm_to_vmem [thread:$0]  %s5, 1024, %s50, [#allocation5], 64, 64, 4
    $region25: #{actor_forward.1} parent=1 // pred_fallthru
      _
    // Predicated region
    $region26: #{actor_forward.1} parent=1 // pred_check
      _
    $region27: #{actor_forward.1} parent=1 // pred_check_branch
      %57 = sbr.rel (0) target = $region29
    $region28: #{actor_forward.1} parent=1 // pred_region
      _
    $region29: #{actor_forward.1} parent=1 // pred_fallthru
      _
    // Predicated region
    $region30: #{actor_forward.1} parent=1 // pred_check
      _
    $region31: #{actor_forward.1} parent=1 // pred_check_branch
      %59 = sbr.rel (0) target = $region33
    $region32: #{actor_forward.1} parent=1 // pred_region
      %60 = dma.done [#allocation3], 1024
    $region33: #{actor_forward.1} parent=1 // pred_fallthru
      _
    // Predicated region
    $region34: #{actor_forward.1} parent=1 // pred_check
      _
    $region35: #{actor_forward.1} parent=1 // pred_check_branch
      %62 = sbr.rel (0) target = $region37
    $region36: #{actor_forward.1} parent=1 // pred_region
      %63 = dma.done [#allocation5], 1024
    $region37: #{actor_forward.1} parent=1 // pred_fallthru
      _
    // Predicated region
    $region38: #{actor_forward.1} parent=1 // pred_check
      _
    $region39: #{actor_forward.1} parent=1 // pred_check_branch
      %65 = sbr.rel (0) target = $region41
    $region40: #{actor_forward.1} parent=1 // pred_region
      %66 = dma.done [#allocation5], 1024
    $region41: #{actor_forward.1} parent=1 // pred_fallthru
      _
    %v68 = vld [vmem:[%s0] sm:$0xff]
    %v69 = vlaneseq
    %v70 = vand.u32 %v69, 127
    %71 = vset.pattern.permute.xlu0 0
    %72 = vperm.xlu0 %71, %v68
    %v73 = vpop.permute.xlu0 %72
    %vm74 = vcmp.eq.s32.totalorder %v70, %v73
    %v75 = vsel %vm74, 1, 0
    %v76 = vcvt.s32.f32 %v75
    %v77 = vpack.c.bf16 %v76, %v76
    %v78 = vld [vmem:[#allocation2] sm:$0xf]
    %v79 = vld [vmem:[#allocation2 + $0x4] sm:$0xf]
    %v80 = vld [vmem:[#allocation2 + $0x8] sm:$0xf]
    %v81 = vld [vmem:[#allocation2 + $0xc] sm:$0xf]
    %v82 = vld [vmem:[#allocation2 + $0x10] sm:$0xf]
    %v83 = vld [vmem:[#allocation2 + $0x14] sm:$0xf]
    %v84 = vld [vmem:[#allocation2 + $0x18] sm:$0xf]
    %v85 = vld [vmem:[#allocation2 + $0x1c] sm:$0xf]
    %v86 = vld [vmem:[#allocation2 + $0x20] sm:$0xf]
    %v87 = vld [vmem:[#allocation2 + $0x24] sm:$0xf]
    %v88 = vld [vmem:[#allocation2 + $0x28] sm:$0xf]
    %v89 = vld [vmem:[#allocation2 + $0x2c] sm:$0xf]
    %v90 = vld [vmem:[#allocation2 + $0x30] sm:$0xf]
    %v91 = vld [vmem:[#allocation2 + $0x34] sm:$0xf]
    %v92 = vld [vmem:[#allocation2 + $0x38] sm:$0xf]
    %v93 = vld [vmem:[#allocation2 + $0x3c] sm:$0xf]
    %v110 = vunpack.c.l.b16 %v78
    %v111 = vunpack.c.l.b16 %v79
    %v112 = vunpack.c.l.b16 %v80
    %v113 = vunpack.c.l.b16 %v81
    %v114 = vunpack.c.l.b16 %v82
    %v115 = vunpack.c.l.b16 %v83
    %v116 = vunpack.c.l.b16 %v84
    %v117 = vunpack.c.l.b16 %v85
    %v118 = vunpack.c.l.b16 %v86
    %v119 = vunpack.c.l.b16 %v87
    %v120 = vunpack.c.l.b16 %v88
    %v121 = vunpack.c.l.b16 %v89
    %v122 = vunpack.c.l.b16 %v90
    %v123 = vunpack.c.l.b16 %v91
    %v124 = vunpack.c.l.b16 %v92
    %v125 = vunpack.c.l.b16 %v93
    %v126 = vpack.c.b16 %v111, %v110
    %v127 = vpack.c.b16 %v113, %v112
    %v128 = vpack.c.b16 %v115, %v114
    %v129 = vpack.c.b16 %v117, %v116
    %v130 = vpack.c.b16 %v119, %v118
    %v131 = vpack.c.b16 %v121, %v120
    %v132 = vpack.c.b16 %v123, %v122
    %v133 = vpack.c.b16 %v125, %v124
    %142 = vmatprep.subr.bf16.mxu0 0
    %143 = vmatpush1.bf16.msra.mxu0 %v133
    %144 = vmatprep.subr.bf16.mxu0 0
    %145 = vmatpush1.bf16.msra.mxu0 %v132
    %146 = vmatprep.subr.bf16.mxu0 0
    %147 = vmatpush1.bf16.msra.mxu0 %v131
    %148 = vmatprep.subr.bf16.mxu0 0
    %149 = vmatpush1.bf16.msra.mxu0 %v130
    %150 = vmatprep.subr.bf16.mxu0 0
    %151 = vmatpush1.bf16.msra.mxu0 %v129
    %152 = vmatprep.subr.bf16.mxu0 0
    %153 = vmatpush1.bf16.msra.mxu0 %v128
    %154 = vmatprep.subr.bf16.mxu0 0
    %155 = vmatpush1.bf16.msra.mxu0 %v127
    %156 = vmatprep.subr.bf16.mxu0 0
    %157 = vmatpush1.bf16.msra.mxu0 %v126
    %158 = vmatprep.subr.bf16.mxu0 0
    %159 = vmatpush2.bf16.msra.mxu0 0
    %160 = vmatprep.subr.bf16.mxu0 0
    %161 = vmatpush2.bf16.msra.mxu0 0
    %162 = vmatprep.subr.bf16.mxu0 0
    %163 = vmatpush2.bf16.msra.mxu0 0
    %164 = vmatprep.subr.bf16.mxu0 0
    %165 = vmatpush2.bf16.msra.mxu0 0
    %166 = vmatprep.subr.bf16.mxu0 0
    %167 = vmatpush2.bf16.msra.mxu0 0
    %168 = vmatprep.subr.bf16.mxu0 0
    %169 = vmatpush2.bf16.msra.mxu0 0
    %170 = vmatprep.subr.bf16.mxu0 0
    %171 = vmatpush2.bf16.msra.mxu0 0
    %172 = vmatprep.subr.bf16.mxu0 0
    %173 = vmatpush2.bf16.msra.mxu0 0
    %174 = vmatprep.mubr.bf16.mxu0 0
    %175 = vmatmul.mubr.bf16.gmra.mxu0 %v77
    %v176 = vpop.f32.mrf.mxu0
    %v177 = vadd.f32 0.0, %v176
    %v178 = vpop.f32.mrf.mxu0
    %v179 = vpop.f32.mrf.mxu0
    %v180 = vpop.f32.mrf.mxu0
    %181 = vdwg.mxu0
    %v182 = vpack.c.bf16 %v177, %v177
    %v183 = vld [vmem:[#allocation4] sm:$0xf]
    %v184 = vld [vmem:[#allocation4 + $0x4] sm:$0xf]
    %v185 = vld [vmem:[#allocation4 + $0x8] sm:$0xf]
    %v186 = vld [vmem:[#allocation4 + $0xc] sm:$0xf]
    %v187 = vld [vmem:[#allocation4 + $0x10] sm:$0xf]
    %v188 = vld [vmem:[#allocation4 + $0x14] sm:$0xf]
    %v189 = vld [vmem:[#allocation4 + $0x18] sm:$0xf]
    %v190 = vld [vmem:[#allocation4 + $0x1c] sm:$0xf]
    %v191 = vld [vmem:[#allocation4 + $0x20] sm:$0xf]
    %v192 = vld [vmem:[#allocation4 + $0x24] sm:$0xf]
    %v193 = vld [vmem:[#allocation4 + $0x28] sm:$0xf]
    %v194 = vld [vmem:[#allocation4 + $0x2c] sm:$0xf]
    %v195 = vld [vmem:[#allocation4 + $0x30] sm:$0xf]
    %v196 = vld [vmem:[#allocation4 + $0x34] sm:$0xf]
    %v197 = vld [vmem:[#allocation4 + $0x38] sm:$0xf]
    %v198 = vld [vmem:[#allocation4 + $0x3c] sm:$0xf]
    %v199 = vld [vmem:[%s4] sm:$0x1]
    %v201 = vlaneseq
    %v202 = vshrl.u32 %v201, 7
    %v203 = vsub.s32 0, %v202
    %v204 = vrot.slane %v199, %v203
    %v222 = vunpack.c.l.b16 %v183
    %v223 = vunpack.c.l.b16 %v184
    %v224 = vunpack.c.l.b16 %v185
    %v225 = vunpack.c.l.b16 %v186
    %v226 = vunpack.c.l.b16 %v187
    %v227 = vunpack.c.l.b16 %v188
    %v228 = vunpack.c.l.b16 %v189
    %v229 = vunpack.c.l.b16 %v190
    %v230 = vunpack.c.l.b16 %v191
    %v231 = vunpack.c.l.b16 %v192
    %v232 = vunpack.c.l.b16 %v193
    %v233 = vunpack.c.l.b16 %v194
    %v234 = vunpack.c.l.b16 %v195
    %v235 = vunpack.c.l.b16 %v196
    %v236 = vunpack.c.l.b16 %v197
    %v237 = vunpack.c.l.b16 %v198
    %v238 = vpack.c.b16 %v223, %v222
    %v239 = vpack.c.b16 %v225, %v224
    %v240 = vpack.c.b16 %v227, %v226
    %v241 = vpack.c.b16 %v229, %v228
    %v242 = vpack.c.b16 %v231, %v230
    %v243 = vpack.c.b16 %v233, %v232
    %v244 = vpack.c.b16 %v235, %v234
    %v245 = vpack.c.b16 %v237, %v236
    %254 = vmatprep.subr.bf16.mxu0 0
    %255 = vmatpush1.bf16.msra.mxu0 %v245
    %256 = vmatprep.subr.bf16.mxu0 0
    %257 = vmatpush1.bf16.msra.mxu0 %v244
    %258 = vmatprep.subr.bf16.mxu0 0
    %259 = vmatpush1.bf16.msra.mxu0 %v243
    %260 = vmatprep.subr.bf16.mxu0 0
    %261 = vmatpush1.bf16.msra.mxu0 %v242
    %262 = vmatprep.subr.bf16.mxu0 0
    %263 = vmatpush1.bf16.msra.mxu0 %v241
    %264 = vmatprep.subr.bf16.mxu0 0
    %265 = vmatpush1.bf16.msra.mxu0 %v240
    %266 = vmatprep.subr.bf16.mxu0 0
    %267 = vmatpush1.bf16.msra.mxu0 %v239
    %268 = vmatprep.subr.bf16.mxu0 0
    %269 = vmatpush1.bf16.msra.mxu0 %v238
    %270 = vmatprep.subr.bf16.mxu0 0
    %271 = vmatpush2.bf16.msra.mxu0 0
    %272 = vmatprep.subr.bf16.mxu0 0
    %273 = vmatpush2.bf16.msra.mxu0 0
    %274 = vmatprep.subr.bf16.mxu0 0
    %275 = vmatpush2.bf16.msra.mxu0 0
    %276 = vmatprep.subr.bf16.mxu0 0
    %277 = vmatpush2.bf16.msra.mxu0 0
    %278 = vmatprep.subr.bf16.mxu0 0
    %279 = vmatpush2.bf16.msra.mxu0 0
    %280 = vmatprep.subr.bf16.mxu0 0
    %281 = vmatpush2.bf16.msra.mxu0 0
    %282 = vmatprep.subr.bf16.mxu0 0
    %283 = vmatpush2.bf16.msra.mxu0 0
    %284 = vmatprep.subr.bf16.mxu0 0
    %285 = vmatpush2.bf16.msra.mxu0 0
    %286 = vmatprep.mubr.bf16.mxu0 0
    %287 = vmatmul.mubr.bf16.gmra.mxu0 %v182
    %v288 = vpop.f32.mrf.mxu0
    %v289 = vadd.f32 %v204, %v288
    %v290 = vpop.f32.mrf.mxu0
    %v291 = vpop.f32.mrf.mxu0
    %v292 = vpop.f32.mrf.mxu0
    %293 = vdwg.mxu0
    %v294 = vmax.f32 %v289, 0.0
    %v295 = vpack.c.bf16 %v294, %v294
    %v296 = vld [vmem:[#allocation6] sm:$0xf]
    %v297 = vld [vmem:[#allocation6 + $0x4] sm:$0xf]
    %v298 = vld [vmem:[#allocation6 + $0x8] sm:$0xf]
    %v299 = vld [vmem:[#allocation6 + $0xc] sm:$0xf]
    %v300 = vld [vmem:[#allocation6 + $0x10] sm:$0xf]
    %v301 = vld [vmem:[#allocation6 + $0x14] sm:$0xf]
    %v302 = vld [vmem:[#allocation6 + $0x18] sm:$0xf]
    %v303 = vld [vmem:[#allocation6 + $0x1c] sm:$0xf]
    %v304 = vld [vmem:[#allocation6 + $0x20] sm:$0xf]
    %v305 = vld [vmem:[#allocation6 + $0x24] sm:$0xf]
    %v306 = vld [vmem:[#allocation6 + $0x28] sm:$0xf]
    %v307 = vld [vmem:[#allocation6 + $0x2c] sm:$0xf]
    %v308 = vld [vmem:[#allocation6 + $0x30] sm:$0xf]
    %v309 = vld [vmem:[#allocation6 + $0x34] sm:$0xf]
    %v310 = vld [vmem:[#allocation6 + $0x38] sm:$0xf]
    %v311 = vld [vmem:[#allocation6 + $0x3c] sm:$0xf]
    %v312 = vld [vmem:[%s6] sm:$0x1]
    %v314 = vlaneseq
    %v315 = vshrl.u32 %v314, 7
    %v316 = vsub.s32 0, %v315
    %v317 = vrot.slane %v312, %v316
    %v335 = vunpack.c.l.b16 %v296
    %v336 = vunpack.c.l.b16 %v297
    %v337 = vunpack.c.l.b16 %v298
    %v338 = vunpack.c.l.b16 %v299
    %v339 = vunpack.c.l.b16 %v300
    %v340 = vunpack.c.l.b16 %v301
    %v341 = vunpack.c.l.b16 %v302
    %v342 = vunpack.c.l.b16 %v303
    %v343 = vunpack.c.l.b16 %v304
    %v344 = vunpack.c.l.b16 %v305
    %v345 = vunpack.c.l.b16 %v306
    %v346 = vunpack.c.l.b16 %v307
    %v347 = vunpack.c.l.b16 %v308
    %v348 = vunpack.c.l.b16 %v309
    %v349 = vunpack.c.l.b16 %v310
    %v350 = vunpack.c.l.b16 %v311
    %v351 = vpack.c.b16 %v336, %v335
    %v352 = vpack.c.b16 %v338, %v337
    %v353 = vpack.c.b16 %v340, %v339
    %v354 = vpack.c.b16 %v342, %v341
    %v355 = vpack.c.b16 %v344, %v343
    %v356 = vpack.c.b16 %v346, %v345
    %v357 = vpack.c.b16 %v348, %v347
    %v358 = vpack.c.b16 %v350, %v349
    %367 = vmatprep.subr.bf16.mxu0 0
    %368 = vmatpush1.bf16.msra.mxu0 %v358
    %369 = vmatprep.subr.bf16.mxu0 0
    %370 = vmatpush1.bf16.msra.mxu0 %v357
    %371 = vmatprep.subr.bf16.mxu0 0
    %372 = vmatpush1.bf16.msra.mxu0 %v356
    %373 = vmatprep.subr.bf16.mxu0 0
    %374 = vmatpush1.bf16.msra.mxu0 %v355
    %375 = vmatprep.subr.bf16.mxu0 0
    %376 = vmatpush1.bf16.msra.mxu0 %v354
    %377 = vmatprep.subr.bf16.mxu0 0
    %378 = vmatpush1.bf16.msra.mxu0 %v353
    %379 = vmatprep.subr.bf16.mxu0 0
    %380 = vmatpush1.bf16.msra.mxu0 %v352
    %381 = vmatprep.subr.bf16.mxu0 0
    %382 = vmatpush1.bf16.msra.mxu0 %v351
    %383 = vmatprep.subr.bf16.mxu0 0
    %384 = vmatpush2.bf16.msra.mxu0 0
    %385 = vmatprep.subr.bf16.mxu0 0
    %386 = vmatpush2.bf16.msra.mxu0 0
    %387 = vmatprep.subr.bf16.mxu0 0
    %388 = vmatpush2.bf16.msra.mxu0 0
    %389 = vmatprep.subr.bf16.mxu0 0
    %390 = vmatpush2.bf16.msra.mxu0 0
    %391 = vmatprep.subr.bf16.mxu0 0
    %392 = vmatpush2.bf16.msra.mxu0 0
    %393 = vmatprep.subr.bf16.mxu0 0
    %394 = vmatpush2.bf16.msra.mxu0 0
    %395 = vmatprep.subr.bf16.mxu0 0
    %396 = vmatpush2.bf16.msra.mxu0 0
    %397 = vmatprep.subr.bf16.mxu0 0
    %398 = vmatpush2.bf16.msra.mxu0 0
    %399 = vmatprep.mubr.bf16.mxu0 0
    %400 = vmatmul.mubr.bf16.gmra.mxu0 %v295
    %v401 = vpop.f32.mrf.mxu0
    %v402 = vadd.f32 %v317, %v401
    %v403 = vpop.f32.mrf.mxu0
    %v404 = vpop.f32.mrf.mxu0
    %v405 = vpop.f32.mrf.mxu0
    %406 = vdwg.mxu0
    %vm407 = vcmp.lt.s32.totalorder %v70, 4
    %v408 = vsel %vm407, %v402, -1e+30
    %vm409 = vcmask 64512
    %v410 = vsel %vm409, %v408, -inf
    %411 = vmax.xlane.f32.xlu0 %v410
    %v412 = vpop.xlane.xlu0 %411
    %v413 = vsub.f32 %v408, %v412
    %v414 = vmul.f32 %v413, 1.442695
    %v415 = vpow.pop %v414
    %v416 = vsel %vm407, %v415, 0.0
    %v417 = vsel %vm409, %v416, 0.0
    %418 = vadd.xlane.f32.xlu0 %v417
    %v419 = vpop.xlane.xlu0 %418
    %v420 = vlog2.pop %v419
    %v421 = vmul.f32 %v420, 0.6931472
    %v422 = vmul.f32 %v416, %v413
    %v423 = vsel %vm407, %v422, 0.0
    %v424 = vsel %vm409, %v423, 0.0
    %425 = vadd.xlane.f32.xlu0 %v424
    %v426 = vpop.xlane.xlu0 %425
    %v427 = vrcp.pop %v419
    %v428 = vmul.f32 %v426, %v427
    %v429 = vsub.f32 %v421, %v428
    %v430 = vld [vmem:[%s1] sm:$0xff]
    %v431 = vadd.f32 %v408, %v430
    %v432 = vsel %vm407, %v431, -1e+30
    %v433 = vsel %vm409, %v432, -inf
    %434 = vmax.xlane.f32.xlu0 %v433
    %v435 = vpop.xlane.xlu0 %434
    %vm436 = vcmp.eq.f32.partialorder %v432, %v435
    %v437 = vsel %vm436, %v70, 1073741824
    %v438 = vsel %vm409, %v437, 2147483647
    %v439 = vand.u32 %v438, 65535
    %v440 = vshra.s32 %v438, 16
    %v441 = vcvt.s32.f32 %v439
    %v442 = vcvt.s32.f32 %v440
    %443 = vmin.xlane.f32.xlu0 %v442
    %v444 = vpop.xlane.xlu0 %443
    %vm445 = vcmp.eq.f32.partialorder %v442, %v444
    %v446 = vsel %vm445, %v441, inf
    %447 = vmin.xlane.f32.xlu0 %v446
    %v448 = vpop.xlane.xlu0 %447
    %v449 = vcvt.f32.s32 %v448
    %v450 = vcvt.f32.s32 %v444
    %v451 = vshll.u32 %v450, 16
    %v452 = vadd.s32 %v451, %v449
    %v453 = vsub.f32 %v413, %v421
    %vm454 = vcmp.eq.s32.totalorder %v70, %v452
    %vm455 = vmand %vm454, %vm407
    %v456 = vsel %vm455, %v453, 0.0
    %v457 = vsel %vm409, %v456, 0.0
    %458 = vadd.xlane.f32.xlu0 %v457
    %v459 = vpop.xlane.xlu0 %458
    %vm460 = vcmp.eq.s32.totalorder %v70, 0
    %v461 = vcvt.s32.f32 %v452
    %v462 = vsel %vm460, %v461, 0.0
    %vm463 = vcmp.eq.s32.totalorder %v70, 1
    %v464 = vsel %vm463, %v459, %v462
    %vm465 = vcmp.eq.s32.totalorder %v70, 2
    %v466 = vsel %vm465, %v429, %v464
    %467 = vst.msk [vmem:[%s7] sm:$0xff] %vm409, %v466
    // Predicated region
    $region42: #{actor_forward.1} parent=1 // pred_check
      _
    $region43: #{actor_forward.1} parent=1 // pred_check_branch
      %469 = sbr.rel (0) target = $region45
    $region44: #{actor_forward.1} parent=1 // pred_region
      _
    $region45: #{actor_forward.1} parent=1 // pred_fallthru
      _
    // Predicated region
    $region46: #{actor_forward.1} parent=1 // pred_check
      _
    $region47: #{actor_forward.1} parent=1 // pred_check_branch
      %471 = sbr.rel (0) target = $region49
    $region48: #{actor_forward.1} parent=1 // pred_region
      _
    $region49: #{actor_forward.1} parent=1 // pred_fallthru
      _
    %472 = vsyncpa [#allocation3], 1
    %473 = vsyncpa [#allocation5], 1

</llo_original>
